<compile_context>
chip_gen: v5e
topology: v5e:2x2
jax: 0.10.0
libtpu: 0.0.40
codegen_flags: <defaults>
</compile_context>

<pallas_src>
import numpy as np
import jax
import jax.numpy as jnp
from jax.experimental import pallas as pl
from jax.experimental.pallas import tpu as pltpu


def _neural_filter_kernel(m_ref, x_ref, o_ref):
    # m_ref: (T_out, T_in)       fused real operator (resident across grid)
    # x_ref: (T_in,  LANE_TILE)  lane-dense slab of flattened (batch*state) cols
    # o_ref: (T_out, LANE_TILE)
    o_ref[...] = jnp.dot(m_ref[...], x_ref[...],
                         preferred_element_type=jnp.float32)


def neural_filter_forward(x, w_real, w_imag, n_input_time_steps, fourier_modes):
    """x: (B, T_in, V) float32 -> (B, T_out, V) float32."""
    B, T_in, V = x.shape
    assert T_in == n_input_time_steps
    T_out, F = w_real.shape
    assert F == fourier_modes

    # --- Baked DFT constants (float64 phase in numpy -> no phase error for large T_in).
    n = np.arange(T_in, dtype=np.float64)
    f = np.arange(F, dtype=np.float64)
    theta = 2.0 * np.pi * np.outer(f, n) / float(T_in)            # (F, T_in)
    dft_cos = jnp.asarray(np.cos(theta), dtype=jnp.float32)
    dft_sin = jnp.asarray(np.sin(theta), dtype=jnp.float32)

    # --- Fused real operator (batch-independent, hoisted out of the kernel).
    #     out = Re(W @ rfft(x)[:F]) = (Wr@C + Wi@S) @ x
    M = (jnp.dot(w_real.astype(jnp.float32), dft_cos)
         + jnp.dot(w_imag.astype(jnp.float32), dft_sin))          # (T_out, T_in)

    # --- Lane-dense input layout: (B, T_in, V) -> (T_in, B*V), pad lanes to tile.
    L = B * V
    # Bigger lane tiles amortize per-step overhead; cap at 512 (VMEM-friendly).
    lane_tile = 128 * min(4, max(1, pl.cdiv(L, 128)))
    x2d = jnp.transpose(x, (1, 0, 2)).reshape(T_in, L)
    L_pad = pl.cdiv(L, lane_tile) * lane_tile
    if L_pad != L:
        x2d = jnp.pad(x2d, ((0, 0), (0, L_pad - L)))

    grid = (L_pad // lane_tile,)
    out2d = pl.pallas_call(
        _neural_filter_kernel,
        out_shape=jax.ShapeDtypeStruct((T_out, L_pad), jnp.float32),
        grid_spec=pltpu.PrefetchScalarGridSpec(
            num_scalar_prefetch=0,
            grid=grid,
            in_specs=[
                pl.BlockSpec((T_out, T_in), lambda j: (0, 0)),       # M (full extent, resident)
                pl.BlockSpec((T_in, lane_tile), lambda j: (0, j)),   # x lane tile
            ],
            out_specs=pl.BlockSpec((T_out, lane_tile), lambda j: (0, j)),
        ),
        compiler_params=pltpu.CompilerParams(
            dimension_semantics=("parallel",)),
    )(M, x2d)

    # --- Back to (B, T_out, V).
    return out2d[:, :L].reshape(T_out, B, V).transpose(1, 0, 2)


def _reference_forward(x, w_real, w_imag, n_input_time_steps, fourier_modes):
    """Pure-JAX reference mirroring the PyTorch module."""
    X = jnp.fft.rfft(x, n=n_input_time_steps, axis=1)[:, :fourier_modes, :]
    W = w_real + 1j * w_imag
    out_c = jnp.einsum('bfv,tf->btv', X, W)
    return jnp.real(out_c).astype(jnp.float32)   # .to(torch.float32) keeps the real part


if __name__ == "__main__":
    # Module configuration (small, consistent with the forward pass).
    n_input_time_steps = 16
    n_output_time_steps = 8
    n_input_state_variables = 4
    n_output_state_variables = 4   # unused by forward (as in the PyTorch module)
    fourier_modes = n_input_time_steps // 2 + 1   # default: 9

    key = jax.random.PRNGKey(0)
    k_x, k_wr, k_wi = jax.random.split(key, 3)

    batch = 2
    x = jax.random.normal(
        k_x, (batch, n_input_time_steps, n_input_state_variables), dtype=jnp.float32)

    # torch.rand(..., dtype=torch.cfloat) -> uniform [0,1) real and imag parts.
    w_real = jax.random.uniform(
        k_wr, (n_output_time_steps, fourier_modes), dtype=jnp.float32)
    w_imag = jax.random.uniform(
        k_wi, (n_output_time_steps, fourier_modes), dtype=jnp.float32)

    # Jit the wrapper so baked DFT constants / fused operator fold at trace time.
    fwd = jax.jit(neural_filter_forward, static_argnums=(3, 4))

    out = fwd(x, w_real, w_imag, n_input_time_steps, fourier_modes)
    out = jax.block_until_ready(out)

    ref = _reference_forward(x, w_real, w_imag, n_input_time_steps, fourier_modes)
    np.testing.assert_allclose(np.asarray(out), np.asarray(ref), rtol=2e-3, atol=2e-3)

    print("KERNEL_OK")
</pallas_src>

<mosaic_0001>
module attributes {stable_mosaic.version = 11 : i64} {
  func.func @_neural_filter_kernel(%arg0: i32, %arg1: memref<8x16xf32, #tpu.memory_space<vmem>>, %arg2: memref<16x128xf32, #tpu.memory_space<vmem>>, %arg3: memref<8x128xf32, #tpu.memory_space<vmem>>) attributes {dimension_semantics = [#tpu.dimension_semantics<parallel>], iteration_bounds = array<i64: 1>, scalar_prefetch = 0 : i64, scratch_operands = 0 : i64, tpu.core_type = #tpu.core_type<tc>, window_params = [{pipeline_mode = #tpu.pipeline_mode<synchronous>, transform_indices = @transform_0, window_bounds = array<i64: 8, 16>}, {transform_indices = @transform_1, window_bounds = array<i64: 16, 128>}, {transform_indices = @transform_2, window_bounds = array<i64: 8, 128>}]} {
    %c0 = arith.constant 0 : index
    %c0_0 = arith.constant 0 : index
    %0 = vector.load %arg1[%c0, %c0_0] : memref<8x16xf32, #tpu.memory_space<vmem>>, vector<8x16xf32>
    %c0_1 = arith.constant 0 : index
    %c0_2 = arith.constant 0 : index
    %1 = vector.load %arg2[%c0_1, %c0_2] : memref<16x128xf32, #tpu.memory_space<vmem>>, vector<16x128xf32>
    %cst = arith.constant dense<0.000000e+00> : vector<8x128xf32>
    %2 = tpu.matmul %0, %1, %cst {dimension_numbers = #tpu.dot_dimension_numbers<[1], [0], [0], [1], [0, 0, 1, 1], [], []>} : vector<8x16xf32>, vector<16x128xf32>, vector<8x128xf32> -> vector<8x128xf32>
    %c0_3 = arith.constant 0 : index
    %c0_4 = arith.constant 0 : index
    %3 = vector.load %arg3[%c0_3, %c0_4] : memref<8x128xf32, #tpu.memory_space<vmem>>, vector<8x128xf32>
    tpu.vector_store %arg3[%c0_3, %c0_4], %2 {strides = array<i32>} : memref<8x128xf32, #tpu.memory_space<vmem>>, vector<8x128xf32>,
    return
  }
  func.func @transform_0(%arg0: i32) -> (i32, i32) {
    %c0_i32 = arith.constant 0 : i32
    %c0_i32_0 = arith.constant 0 : i32
    %c0_i32_1 = arith.constant 0 : i32
    return %c0_i32, %c0_i32_0 : i32, i32
  }
  func.func @transform_1(%arg0: i32) -> (i32, i32) {
    %c0_i32 = arith.constant 0 : i32
    %c0_i32_0 = arith.constant 0 : i32
    return %c0_i32, %arg0 : i32, i32
  }
  func.func @transform_2(%arg0: i32) -> (i32, i32) {
    %c0_i32 = arith.constant 0 : i32
    %c0_i32_0 = arith.constant 0 : i32
    return %c0_i32, %arg0 : i32, i32
  }
}

</mosaic_0001>

<llo_original>
// kernel: neural_filter_forward.1
$region0: #{neural_filter_forward.1}
  #allocation0 [shape = 'u32[]', space=smem, size = 0x4, offset = 0x4, fixed_abs, tag = 'smem constant byte address 0x4 - core index']
  #allocation1 [shape = 'u32[72,128]{1,0:T(1,128)}', space=vmem, size = 0x9000, scoped, tag = 'internal scratch']
  %s0 = inlined_call_operand.vmem [shape: f32[8,16], index: 0, kind: input, shape index: {}]
  %s1 = inlined_call_operand.vmem [shape: f32[16,128], index: 1, kind: input, shape index: {}]
  %s2 = inlined_call_operand.vmem [shape: f32[8,128], index: 2, kind: output, shape index: {}]
  %s3 = sld [smem:[#allocation0]]
  $region18: #{neural_filter_forward.1} parent=0
    _
  %s5 = ssub.s32 1, %s3
  %s6 = scalar_select 0, %s5, %s3
  // Predicated region
  $region2: #{neural_filter_forward.1} parent=0 // pred_check
    _
  $region3: #{neural_filter_forward.1} parent=0 // pred_check_branch
    %8 = sbr.rel (0) target = $region5
  $region4: #{neural_filter_forward.1} parent=0 // pred_region
    _
  $region5: #{neural_filter_forward.1} parent=0 // pred_fallthru
    _
  // Predicated region
  $region6: #{neural_filter_forward.1} parent=0 // pred_check
    _
  $region7: #{neural_filter_forward.1} parent=0 // pred_check_branch
    %10 = sbr.rel (0) target = $region9
  $region8: #{neural_filter_forward.1} parent=0 // pred_region
    _
  $region9: #{neural_filter_forward.1} parent=0 // pred_fallthru
    _
  %v11 = vld [vmem:[%s0] sm:$0xff]
  %v12 = vld [vmem:[%s1] sm:$0xff]
  %v13 = vld [vmem:[%s1 + $0x8] sm:$0xff]
  %vm14 = vcmask 130048
  %v16 = vsel %vm14, %v11, 0
  %18 = vmatpush.msra.mxu0 0.0
  %19 = vmatpush.msra.mxu0 0.0
  %20 = vmatpush.msra.mxu0 0.0
  %21 = vmatpush.msra.mxu0 0.0
  %22 = vmatpush.msra.mxu0 0.0
  %23 = vmatpush.msra.mxu0 0.0
  %24 = vmatpush.msra.mxu0 0.0
  %25 = vmatpush.msra.mxu0 0.0
  %26 = vmatpush.msra.mxu0 0.0
  %27 = vmatpush.msra.mxu0 0.0
  %28 = vmatpush.msra.mxu0 0.0
  %29 = vmatpush.msra.mxu0 0.0
  %30 = vmatpush.msra.mxu0 0.0
  %31 = vmatpush.msra.mxu0 0.0
  %32 = vmatpush.msra.mxu0 %v13
  %33 = vmatpush.msra.mxu0 %v12
  %34 = vmatmul.f32.gmra.mxu0 %v16
  %v35 = vpop.f32.mrf.mxu0
  %v36 = vadd.f32 0.0, %v35
  %37 = vdwg.mxu0
  %38 = vst [vmem:[%s2] sm:$0xff] %v36
  // Predicated region
  $region10: #{neural_filter_forward.1} parent=0 // pred_check
    _
  $region11: #{neural_filter_forward.1} parent=0 // pred_check_branch
    %40 = sbr.rel (0) target = $region13
  $region12: #{neural_filter_forward.1} parent=0 // pred_region
    _
  $region13: #{neural_filter_forward.1} parent=0 // pred_fallthru
    _
  // Predicated region
  $region14: #{neural_filter_forward.1} parent=0 // pred_check
    _
  $region15: #{neural_filter_forward.1} parent=0 // pred_check_branch
    %42 = sbr.rel (0) target = $region17
  $region16: #{neural_filter_forward.1} parent=0 // pred_region
    _
  $region17: #{neural_filter_forward.1} parent=0 // pred_fallthru
    _

</llo_original>
